<compile_context>
chip_gen: v7x
topology: tpu7x:2x2x1
jax: 0.10.0
libtpu: 0.0.40
codegen_flags: <defaults>
</compile_context>

<pallas_src>
import numpy as np
import jax
import jax.numpy as jnp
from jax.experimental import pallas as pl
from jax.experimental.pallas import tpu as pltpu


_SQRT_2_OVER_PI = 0.7978845608028654


def _gelu_tanh_f32(x):
    # TODO(synk): nn.GELU() defaults to the exact erf form; we use the tanh
    # approximation (== nn.GELU(approximate='tanh')), which maps onto the TPU
    # EUP. Max abs deviation from erf-GELU is ~1e-3.
    return 0.5 * x * (1.0 + jnp.tanh(_SQRT_2_OVER_PI * (x + 0.044715 * x * x * x)))


def _round_up(n, m):
    return (n + m - 1) // m * m


# ------------------------------------------------------------------
# Pallas kernel: one row-slab of the fused FFN
# ------------------------------------------------------------------
def ffn_kernel(x_ref, w1_ref, b1_ref, w2_ref, b2_ref, o_ref):
    x_f32 = x_ref[...].astype(jnp.float32)                    # (tm, D)
    # MXU matmuls on the native bf16 path, f32 accumulation.
    h = jnp.dot(x_f32.astype(jnp.bfloat16), w1_ref[...],
                preferred_element_type=jnp.float32) + b1_ref[...]
    h = _gelu_tanh_f32(h)                                      # (tm, F) f32
    y = jnp.dot(h.astype(jnp.bfloat16), w2_ref[...],
                preferred_element_type=jnp.float32) + b2_ref[...]
    o_ref[...] = (x_f32 + y).astype(o_ref.dtype)               # residual add


# ------------------------------------------------------------------
# VMEM budget: activations (double-buffered) + resident bf16 weights +
# the (tm, F) GELU intermediate, with generous headroom for temporaries.
# ------------------------------------------------------------------
def _vmem_limit_bytes(tm, D, F, x_itemsize, weight_bufs):
    act = 2 * (tm * D * max(x_itemsize, 4)) * 2        # x tile + out tile, 2 bufs
    wgt = weight_bufs * 2 * (D * F + F * D)            # bf16 weights
    bias = weight_bufs * 4 * (F + D)                   # f32 biases
    inter = tm * F * (4 + 2)                           # f32 GELU interm. + bf16 copy
    total = act + wgt + bias + inter
    return int(min(max(2 * total + (8 << 20), 32 << 20), 96 << 20))


def _build_ffn_call(M, D, F, tm, x_dtype, *, single_buffer_weights):
    if single_buffer_weights:
        w_kwargs = dict(pipeline_mode=pl.Buffered(1))
        weight_bufs = 1
    else:
        w_kwargs = {}
        weight_bufs = 2

    itemsize = jnp.dtype(x_dtype).itemsize
    flops = 4 * M * D * F                              # two matmuls
    bytes_accessed = 2 * M * D * itemsize + 2 * (D * F + F * D) + 4 * (F + D)

    return pl.pallas_call(
        ffn_kernel,
        out_shape=jax.ShapeDtypeStruct((M, D), x_dtype),
        grid=(pl.cdiv(M, tm),),
        in_specs=[
            pl.BlockSpec((tm, D), lambda i: (i, 0)),            # activations: tiled
            pl.BlockSpec((D, F), lambda i: (0, 0), **w_kwargs),  # w1: VMEM-resident
            pl.BlockSpec((1, F), lambda i: (0, 0), **w_kwargs),  # b1: VMEM-resident
            pl.BlockSpec((F, D), lambda i: (0, 0), **w_kwargs),  # w2: VMEM-resident
            pl.BlockSpec((1, D), lambda i: (0, 0), **w_kwargs),  # b2: VMEM-resident
        ],
        out_specs=pl.BlockSpec((tm, D), lambda i: (i, 0)),
        compiler_params=pltpu.CompilerParams(
            dimension_semantics=("parallel",),
            vmem_limit_bytes=_vmem_limit_bytes(tm, D, F, itemsize, weight_bufs)),
        cost_estimate=pl.CostEstimate(
            flops=flops, transcendentals=M * F, bytes_accessed=bytes_accessed),
    )


# ------------------------------------------------------------------
# Wrapper: no activation pad/upcast passes; weights cast to bf16 once.
# ------------------------------------------------------------------
def ffn_forward(x, w1, b1, w2, b2, *, tm=512):
    """x: (B, T, D). w1: (D, F), b1: (F,), w2: (F, D), b2: (D,).
    Weights are in 'kernel' layout (in_dim, out_dim), i.e. torch W.T."""
    B, T, D = x.shape
    F = w1.shape[1]
    assert w1.shape == (D, F) and w2.shape == (F, D)
    assert b1.shape == (F,) and b2.shape == (D,)

    M = B * T
    tm = max(8, min(_round_up(tm, 8), _round_up(M, 8)))  # rows per step (mult of 8)

    x2 = x.reshape(M, D)                       # metadata-only reshape, no copy
    w1b = w1.astype(jnp.bfloat16)              # MXU full-rate operand dtype
    w2b = w2.astype(jnp.bfloat16)
    b1f = b1.astype(jnp.float32).reshape(1, F)
    b2f = b2.astype(jnp.float32).reshape(1, D)

    try:
        call = _build_ffn_call(M, D, F, tm, x.dtype, single_buffer_weights=True)
        out = call(x2, w1b, b1f, w2b, b2f)
    except Exception:
        # Fallback if this JAX version rejects pipeline_mode=pl.Buffered(1).
        call = _build_ffn_call(M, D, F, tm, x.dtype, single_buffer_weights=False)
        out = call(x2, w1b, b1f, w2b, b2f)

    return out.reshape(B, T, D)


# ------------------------------------------------------------------
# Pure-numpy reference (same GELU formulation, dropout = identity, f32 math)
# ------------------------------------------------------------------
def ffn_reference(x, w1, b1, w2, b2):
    x = np.asarray(x, np.float32)
    w1 = np.asarray(w1, np.float32)
    b1 = np.asarray(b1, np.float32)
    w2 = np.asarray(w2, np.float32)
    b2 = np.asarray(b2, np.float32)
    h = x @ w1 + b1
    h = 0.5 * h * (1.0 + np.tanh(_SQRT_2_OVER_PI * (h + 0.044715 * h ** 3)))
    y = h @ w2 + b2
    return x + y


# ------------------------------------------------------------------
if __name__ == "__main__":
    B, T = 2, 8
    latent_dim, ffn_dim = 32, 64

    key = jax.random.PRNGKey(0)
    kx, k1, k2, k3, k4 = jax.random.split(key, 5)

    bound1 = 1.0 / np.sqrt(latent_dim)   # torch Linear init bound (fan_in)
    bound2 = 1.0 / np.sqrt(ffn_dim)

    x = jax.random.normal(kx, (B, T, latent_dim), jnp.float32)
    w1 = jax.random.uniform(k1, (latent_dim, ffn_dim), jnp.float32, -bound1, bound1)
    b1 = jax.random.uniform(k2, (ffn_dim,), jnp.float32, -bound1, bound1)
    w2 = jax.random.uniform(k3, (ffn_dim, latent_dim), jnp.float32, -bound2, bound2)
    b2 = jax.random.uniform(k4, (latent_dim,), jnp.float32, -bound2, bound2)

    out = jax.block_until_ready(ffn_forward(x, w1, b1, w2, b2))
    assert out.shape == (B, T, latent_dim)

    ref = ffn_reference(x, w1, b1, w2, b2)
    # bf16 matmul operands (with f32 accumulation) deviate from the f32 numpy
    # reference at the ~1e-2 level; tolerance relaxed accordingly.
    np.testing.assert_allclose(np.asarray(out), ref, rtol=2e-2, atol=2e-2)

    print("KERNEL_OK")
</pallas_src>

<mosaic_0001>
module attributes {stable_mosaic.version = 11 : i64} {
  func.func @ffn_kernel(%arg0: i32, %arg1: memref<16x32xf32, #tpu.memory_space<vmem>>, %arg2: memref<32x64xbf16, #tpu.memory_space<vmem>>, %arg3: memref<1x64xf32, #tpu.memory_space<vmem>>, %arg4: memref<64x32xbf16, #tpu.memory_space<vmem>>, %arg5: memref<1x32xf32, #tpu.memory_space<vmem>>, %arg6: memref<16x32xf32, #tpu.memory_space<vmem>>) attributes {dimension_semantics = [#tpu.dimension_semantics<parallel>], iteration_bounds = array<i64: 1>, scalar_prefetch = 0 : i64, scratch_operands = 0 : i64, tpu.core_type = #tpu.core_type<tc>, window_params = [{transform_indices = @transform_0, window_bounds = array<i64: 16, 32>}, {pipeline_mode = #tpu.pipeline_mode<synchronous>, transform_indices = @transform_1, window_bounds = array<i64: 32, 64>}, {pipeline_mode = #tpu.pipeline_mode<synchronous>, transform_indices = @transform_2, window_bounds = array<i64: 1, 64>}, {pipeline_mode = #tpu.pipeline_mode<synchronous>, transform_indices = @transform_3, window_bounds = array<i64: 64, 32>}, {pipeline_mode = #tpu.pipeline_mode<synchronous>, transform_indices = @transform_4, window_bounds = array<i64: 1, 32>}, {transform_indices = @transform_5, window_bounds = array<i64: 16, 32>}]} {
    %c0 = arith.constant 0 : index
    %c0_0 = arith.constant 0 : index
    %0 = vector.load %arg1[%c0, %c0_0] : memref<16x32xf32, #tpu.memory_space<vmem>>, vector<16x32xf32>
    %1 = arith.truncf %0 : vector<16x32xf32> to vector<16x32xbf16>
    %c0_1 = arith.constant 0 : index
    %c0_2 = arith.constant 0 : index
    %2 = vector.load %arg2[%c0_1, %c0_2] : memref<32x64xbf16, #tpu.memory_space<vmem>>, vector<32x64xbf16>
    %cst = arith.constant dense<0.000000e+00> : vector<16x64xf32>
    %3 = tpu.matmul %1, %2, %cst {dimension_numbers = #tpu.dot_dimension_numbers<[1], [0], [0], [1], [0, 0, 1, 1], [], []>} : vector<16x32xbf16>, vector<32x64xbf16>, vector<16x64xf32> -> vector<16x64xf32>
    %c0_3 = arith.constant 0 : index
    %c0_4 = arith.constant 0 : index
    %4 = vector.load %arg3[%c0_3, %c0_4] : memref<1x64xf32, #tpu.memory_space<vmem>>, vector<1x64xf32>
    %5 = vector.broadcast %4 : vector<1x64xf32> to vector<16x64xf32>
    %6 = arith.addf %3, %5 : vector<16x64xf32>
    %cst_5 = arith.constant 5.000000e-01 : f32
    %7 = vector.broadcast %cst_5 : f32 to vector<16x64xf32>
    %8 = arith.mulf %7, %6 : vector<16x64xf32>
    %cst_6 = arith.constant 4.471500e-02 : f32
    %9 = vector.broadcast %cst_6 : f32 to vector<16x64xf32>
    %10 = arith.mulf %9, %6 : vector<16x64xf32>
    %11 = arith.mulf %10, %6 : vector<16x64xf32>
    %12 = arith.mulf %11, %6 : vector<16x64xf32>
    %13 = arith.addf %6, %12 : vector<16x64xf32>
    %cst_7 = arith.constant 0.797884583 : f32
    %14 = vector.broadcast %cst_7 : f32 to vector<16x64xf32>
    %15 = arith.mulf %14, %13 : vector<16x64xf32>
    %16 = math.tanh %15 : vector<16x64xf32>
    %cst_8 = arith.constant 1.000000e+00 : f32
    %17 = vector.broadcast %cst_8 : f32 to vector<16x64xf32>
    %18 = arith.addf %17, %16 : vector<16x64xf32>
    %19 = arith.mulf %8, %18 : vector<16x64xf32>
    %20 = arith.truncf %19 : vector<16x64xf32> to vector<16x64xbf16>
    %c0_9 = arith.constant 0 : index
    %c0_10 = arith.constant 0 : index
    %21 = vector.load %arg4[%c0_9, %c0_10] : memref<64x32xbf16, #tpu.memory_space<vmem>>, vector<64x32xbf16>
    %cst_11 = arith.constant dense<0.000000e+00> : vector<16x32xf32>
    %22 = tpu.matmul %20, %21, %cst_11 {dimension_numbers = #tpu.dot_dimension_numbers<[1], [0], [0], [1], [0, 0, 1, 1], [], []>} : vector<16x64xbf16>, vector<64x32xbf16>, vector<16x32xf32> -> vector<16x32xf32>
    %c0_12 = arith.constant 0 : index
    %c0_13 = arith.constant 0 : index
    %23 = vector.load %arg5[%c0_12, %c0_13] : memref<1x32xf32, #tpu.memory_space<vmem>>, vector<1x32xf32>
    %24 = vector.broadcast %23 : vector<1x32xf32> to vector<16x32xf32>
    %25 = arith.addf %22, %24 : vector<16x32xf32>
    %26 = arith.addf %0, %25 : vector<16x32xf32>
    %c0_14 = arith.constant 0 : index
    %c0_15 = arith.constant 0 : index
    %27 = vector.load %arg6[%c0_14, %c0_15] : memref<16x32xf32, #tpu.memory_space<vmem>>, vector<16x32xf32>
    tpu.vector_store %arg6[%c0_14, %c0_15], %26 {strides = array<i32>} : memref<16x32xf32, #tpu.memory_space<vmem>>, vector<16x32xf32>,
    return
  }
  func.func @transform_0(%arg0: i32) -> (i32, i32) {
    %c0_i32 = arith.constant 0 : i32
    %c0_i32_0 = arith.constant 0 : i32
    return %arg0, %c0_i32 : i32, i32
  }
  func.func @transform_1(%arg0: i32) -> (i32, i32) {
    %c0_i32 = arith.constant 0 : i32
    %c0_i32_0 = arith.constant 0 : i32
    %c0_i32_1 = arith.constant 0 : i32
    return %c0_i32, %c0_i32_0 : i32, i32
  }
  func.func @transform_2(%arg0: i32) -> (i32, i32) {
    %c0_i32 = arith.constant 0 : i32
    %c0_i32_0 = arith.constant 0 : i32
    %c0_i32_1 = arith.constant 0 : i32
    return %c0_i32, %c0_i32_0 : i32, i32
  }
  func.func @transform_3(%arg0: i32) -> (i32, i32) {
    %c0_i32 = arith.constant 0 : i32
    %c0_i32_0 = arith.constant 0 : i32
    %c0_i32_1 = arith.constant 0 : i32
    return %c0_i32, %c0_i32_0 : i32, i32
  }
  func.func @transform_4(%arg0: i32) -> (i32, i32) {
    %c0_i32 = arith.constant 0 : i32
    %c0_i32_0 = arith.constant 0 : i32
    %c0_i32_1 = arith.constant 0 : i32
    return %c0_i32, %c0_i32_0 : i32, i32
  }
  func.func @transform_5(%arg0: i32) -> (i32, i32) {
    %c0_i32 = arith.constant 0 : i32
    %c0_i32_0 = arith.constant 0 : i32
    return %arg0, %c0_i32 : i32, i32
  }
}

module attributes {stable_mosaic.version = 11 : i64} {
  func.func @ffn_kernel(%arg0: i32, %arg1: memref<16x32xf32, #tpu.memory_space<vmem>>, %arg2: memref<32x64xbf16, #tpu.memory_space<vmem>>, %arg3: memref<1x64xf32, #tpu.memory_space<vmem>>, %arg4: memref<64x32xbf16, #tpu.memory_space<vmem>>, %arg5: memref<1x32xf32, #tpu.memory_space<vmem>>, %arg6: memref<16x32xf32, #tpu.memory_space<vmem>>) attributes {dimension_semantics = [#tpu.dimension_semantics<parallel>], iteration_bounds = array<i64: 1>, scalar_prefetch = 0 : i64, scratch_operands = 0 : i64, tpu.core_type = #tpu.core_type<tc>, window_params = [{transform_indices = @transform_0, window_bounds = array<i64: 16, 32>}, {pipeline_mode = #tpu.pipeline_mode<synchronous>, transform_indices = @transform_1, window_bounds = array<i64: 32, 64>}, {pipeline_mode = #tpu.pipeline_mode<synchronous>, transform_indices = @transform_2, window_bounds = array<i64: 1, 64>}, {pipeline_mode = #tpu.pipeline_mode<synchronous>, transform_indices = @transform_3, window_bounds = array<i64: 64, 32>}, {pipeline_mode = #tpu.pipeline_mode<synchronous>, transform_indices = @transform_4, window_bounds = array<i64: 1, 32>}, {transform_indices = @transform_5, window_bounds = array<i64: 16, 32>}]} {
    %c0 = arith.constant 0 : index
    %c0_0 = arith.constant 0 : index
    %0 = vector.load %arg1[%c0, %c0_0] : memref<16x32xf32, #tpu.memory_space<vmem>>, vector<16x32xf32>
    %1 = arith.truncf %0 : vector<16x32xf32> to vector<16x32xbf16>
    %c0_1 = arith.constant 0 : index
    %c0_2 = arith.constant 0 : index
    %2 = vector.load %arg2[%c0_1, %c0_2] : memref<32x64xbf16, #tpu.memory_space<vmem>>, vector<32x64xbf16>
    %cst = arith.constant dense<0.000000e+00> : vector<16x64xf32>
    %3 = tpu.matmul %1, %2, %cst {dimension_numbers = #tpu.dot_dimension_numbers<[1], [0], [0], [1], [0, 0, 1, 1], [], []>} : vector<16x32xbf16>, vector<32x64xbf16>, vector<16x64xf32> -> vector<16x64xf32>
    %c0_3 = arith.constant 0 : index
    %c0_4 = arith.constant 0 : index
    %4 = vector.load %arg3[%c0_3, %c0_4] : memref<1x64xf32, #tpu.memory_space<vmem>>, vector<1x64xf32>
    %5 = vector.broadcast %4 : vector<1x64xf32> to vector<16x64xf32>
    %6 = arith.addf %3, %5 : vector<16x64xf32>
    %cst_5 = arith.constant 5.000000e-01 : f32
    %7 = vector.broadcast %cst_5 : f32 to vector<16x64xf32>
    %8 = arith.mulf %7, %6 : vector<16x64xf32>
    %cst_6 = arith.constant 4.471500e-02 : f32
    %9 = vector.broadcast %cst_6 : f32 to vector<16x64xf32>
    %10 = arith.mulf %9, %6 : vector<16x64xf32>
    %11 = arith.mulf %10, %6 : vector<16x64xf32>
    %12 = arith.mulf %11, %6 : vector<16x64xf32>
    %13 = arith.addf %6, %12 : vector<16x64xf32>
    %cst_7 = arith.constant 0.797884583 : f32
    %14 = vector.broadcast %cst_7 : f32 to vector<16x64xf32>
    %15 = arith.mulf %14, %13 : vector<16x64xf32>
    %16 = math.tanh %15 : vector<16x64xf32>
    %cst_8 = arith.constant 1.000000e+00 : f32
    %17 = vector.broadcast %cst_8 : f32 to vector<16x64xf32>
    %18 = arith.addf %17, %16 : vector<16x64xf32>
    %19 = arith.mulf %8, %18 : vector<16x64xf32>
    %20 = arith.truncf %19 : vector<16x64xf32> to vector<16x64xbf16>
    %c0_9 = arith.constant 0 : index
    %c0_10 = arith.constant 0 : index
    %21 = vector.load %arg4[%c0_9, %c0_10] : memref<64x32xbf16, #tpu.memory_space<vmem>>, vector<64x32xbf16>
    %cst_11 = arith.constant dense<0.000000e+00> : vector<16x32xf32>
    %22 = tpu.matmul %20, %21, %cst_11 {dimension_numbers = #tpu.dot_dimension_numbers<[1], [0], [0], [1], [0, 0, 1, 1], [], []>} : vector<16x64xbf16>, vector<64x32xbf16>, vector<16x32xf32> -> vector<16x32xf32>
    %c0_12 = arith.constant 0 : index
    %c0_13 = arith.constant 0 : index
    %23 = vector.load %arg5[%c0_12, %c0_13] : memref<1x32xf32, #tpu.memory_space<vmem>>, vector<1x32xf32>
    %24 = vector.broadcast %23 : vector<1x32xf32> to vector<16x32xf32>
    %25 = arith.addf %22, %24 : vector<16x32xf32>
    %26 = arith.addf %0, %25 : vector<16x32xf32>
    %c0_14 = arith.constant 0 : index
    %c0_15 = arith.constant 0 : index
    %27 = vector.load %arg6[%c0_14, %c0_15] : memref<16x32xf32, #tpu.memory_space<vmem>>, vector<16x32xf32>
    tpu.vector_store %arg6[%c0_14, %c0_15], %26 {strides = array<i32>} : memref<16x32xf32, #tpu.memory_space<vmem>>, vector<16x32xf32>,
    return
  }
  func.func @transform_0(%arg0: i32) -> (i32, i32) {
    %c0_i32 = arith.constant 0 : i32
    %c0_i32_0 = arith.constant 0 : i32
    return %arg0, %c0_i32 : i32, i32
  }
  func.func @transform_1(%arg0: i32) -> (i32, i32) {
    %c0_i32 = arith.constant 0 : i32
    %c0_i32_0 = arith.constant 0 : i32
    %c0_i32_1 = arith.constant 0 : i32
    return %c0_i32, %c0_i32_0 : i32, i32
  }
  func.func @transform_2(%arg0: i32) -> (i32, i32) {
    %c0_i32 = arith.constant 0 : i32
    %c0_i32_0 = arith.constant 0 : i32
    %c0_i32_1 = arith.constant 0 : i32
    return %c0_i32, %c0_i32_0 : i32, i32
  }
  func.func @transform_3(%arg0: i32) -> (i32, i32) {
    %c0_i32 = arith.constant 0 : i32
    %c0_i32_0 = arith.constant 0 : i32
    %c0_i32_1 = arith.constant 0 : i32
    return %c0_i32, %c0_i32_0 : i32, i32
  }
  func.func @transform_4(%arg0: i32) -> (i32, i32) {
    %c0_i32 = arith.constant 0 : i32
    %c0_i32_0 = arith.constant 0 : i32
    %c0_i32_1 = arith.constant 0 : i32
    return %c0_i32, %c0_i32_0 : i32, i32
  }
  func.func @transform_5(%arg0: i32) -> (i32, i32) {
    %c0_i32 = arith.constant 0 : i32
    %c0_i32_0 = arith.constant 0 : i32
    return %arg0, %c0_i32 : i32, i32
  }
}

</mosaic_0001>

<llo_original>
// kernel: tpu_custom_call.1
$region0: #{tpu_custom_call.1}
  #allocation0 [shape = 'u32[]', space=smem, size = 0x4, offset = 0x4, fixed_abs, tag = 'smem constant byte address 0x4 - core index']
  #allocation1 [shape = 'u32[144,128]{1,0:T(1,128)}', space=vmem, size = 0x12000, scoped, tag = 'internal scratch']
  %s0 = inlined_call_operand.vmem [shape: f32[16,32], index: 0, kind: input, shape index: {}]
  %s1 = inlined_call_operand.vmem [shape: bf16[32,64], index: 1, kind: input, shape index: {}]
  %s2 = inlined_call_operand.vmem [shape: f32[1,64], index: 2, kind: input, shape index: {}]
  %s3 = inlined_call_operand.vmem [shape: bf16[64,32], index: 3, kind: input, shape index: {}]
  %s4 = inlined_call_operand.vmem [shape: f32[1,32], index: 4, kind: input, shape index: {}]
  %s5 = inlined_call_operand.hbm [shape: f32[16,32], index: 5, kind: output, shape index: {}]
  %s6 = sld [smem:[#allocation0]]
  $region30: #{tpu_custom_call.1} parent=0
    _
  %s8 = ssub.s32 1, %s6
  %s9 = scalar_select 0, %s8, %s6
  $region1: #{tpu_custom_call.1} parent=0
    #allocation2 [shape = 'u8[8192]{0}', space=vmem, size = 0x2000, scoped, tag = 'output window, operand 0, single buffered']
    #allocation3 [shape = 's32[1]{0}', space=sflag, size = 0x4, scoped, tag = 'scoped memory for tpu_custom_call.1']
    %10 = vsyncpa [#allocation3], 0
    // Predicated region
    $region2: #{tpu_custom_call.1} parent=1 // pred_check
      _
    $region3: #{tpu_custom_call.1} parent=1 // pred_check_branch
      %12 = sbr.rel (0) target = $region5
    $region4: #{tpu_custom_call.1} parent=1 // pred_region
      _
    $region5: #{tpu_custom_call.1} parent=1 // pred_fallthru
      _
    // Predicated region
    $region6: #{tpu_custom_call.1} parent=1 // pred_check
      _
    $region7: #{tpu_custom_call.1} parent=1 // pred_check_branch
      %14 = sbr.rel (0) target = $region9
    $region8: #{tpu_custom_call.1} parent=1 // pred_region
      _
    $region9: #{tpu_custom_call.1} parent=1 // pred_fallthru
      _
    // Predicated region
    $region10: #{tpu_custom_call.1} parent=1 // pred_check
      _
    $region11: #{tpu_custom_call.1} parent=1 // pred_check_branch
      %16 = sbr.rel (0) target = $region13
    $region12: #{tpu_custom_call.1} parent=1 // pred_region
      _
    $region13: #{tpu_custom_call.1} parent=1 // pred_fallthru
      _
    // Predicated region
    $region14: #{tpu_custom_call.1} parent=1 // pred_check
      _
    $region15: #{tpu_custom_call.1} parent=1 // pred_check_branch
      %18 = sbr.rel (0) target = $region17
    $region16: #{tpu_custom_call.1} parent=1 // pred_region
      _
    $region17: #{tpu_custom_call.1} parent=1 // pred_fallthru
      _
    // Predicated region
    $region18: #{tpu_custom_call.1} parent=1 // pred_check
      _
    $region19: #{tpu_custom_call.1} parent=1 // pred_check_branch
      %20 = sbr.rel (0) target = $region21
    $region20: #{tpu_custom_call.1} parent=1 // pred_region
      _
    $region21: #{tpu_custom_call.1} parent=1 // pred_fallthru
      _
    %v22 = vld [vmem:[%s0] sm:$0xff]
    %v23 = vld [vmem:[%s0 + $0x8] sm:$0xff]
    %v24 = vpack.c.bf16 %v23, %v22
    %v25 = vld [vmem:[%s1] sm:$0xf]
    %v26 = vld [vmem:[%s1 + $0x4] sm:$0xf]
    %v27 = vld [vmem:[%s1 + $0x8] sm:$0xf]
    %v28 = vld [vmem:[%s1 + $0xc] sm:$0xf]
    %v29 = vld [vmem:[%s2] sm:$0x1]
    %v31 = vlaneseq
    %v32 = vshrl.u32 %v31, 7
    %v33 = vsub.s32 0, %v32
    %v34 = vrot.slane %v29, %v33
    %v40 = vunpack.c.l.b16 %v25
    %v41 = vunpack.c.l.b16 %v26
    %v42 = vunpack.c.l.b16 %v27
    %v43 = vunpack.c.l.b16 %v28
    %v44 = vpack.c.b16 %v41, %v40
    %v45 = vpack.c.b16 %v43, %v42
    %vm48 = vcmask 261120
    %v50 = vsel %vm48, %v24, 0
    %52 = vmatprep.subr.bf16.mxu0 0
    %53 = vmatpush1.bf16.msra.mxu0 %v44
    %54 = vmatprep.subr.bf16.mxu0 0
    %55 = vmatpush1.bf16.msra.mxu0 %v45
    %56 = vmatprep.subr.bf16.mxu0 0
    %57 = vmatpush1.bf16.msra.mxu0 0
    %58 = vmatprep.subr.bf16.mxu0 0
    %59 = vmatpush1.bf16.msra.mxu0 0
    %60 = vmatprep.subr.bf16.mxu0 0
    %61 = vmatpush1.bf16.msra.mxu0 0
    %62 = vmatprep.subr.bf16.mxu0 0
    %63 = vmatpush1.bf16.msra.mxu0 0
    %64 = vmatprep.subr.bf16.mxu0 0
    %65 = vmatpush1.bf16.msra.mxu0 0
    %66 = vmatprep.subr.bf16.mxu0 0
    %67 = vmatpush1.bf16.msra.mxu0 0
    %68 = vmatprep.subr.bf16.mxu0 0
    %69 = vmatpush1.bf16.msra.mxu0 0
    %70 = vmatprep.subr.bf16.mxu0 0
    %71 = vmatpush1.bf16.msra.mxu0 0
    %72 = vmatprep.subr.bf16.mxu0 0
    %73 = vmatpush1.bf16.msra.mxu0 0
    %74 = vmatprep.subr.bf16.mxu0 0
    %75 = vmatpush1.bf16.msra.mxu0 0
    %76 = vmatprep.subr.bf16.mxu0 0
    %77 = vmatpush1.bf16.msra.mxu0 0
    %78 = vmatprep.subr.bf16.mxu0 0
    %79 = vmatpush1.bf16.msra.mxu0 0
    %80 = vmatprep.subr.bf16.mxu0 0
    %81 = vmatpush1.bf16.msra.mxu0 0
    %82 = vmatprep.subr.bf16.mxu0 0
    %83 = vmatpush1.bf16.msra.mxu0 0
    %84 = vmatprep.mubr.bf16.mxu0 0
    %85 = vmatmul.mubr.bf16.gmra.mrb[0].mxu0 %v50
    %v86 = vpop.f32.mrb[0].mxu0
    %v87 = vadd.f32 %v34, %v86
    %v88 = vpop.f32.mrb[0].mxu0
    %v89 = vpop.f32.mrb[0].mxu0
    %v90 = vadd.f32 %v34, %v89
    %v91 = vpop.f32.mrb[0].mxu0
    %92 = vdwg.mxu0
    %v93 = vmul.f32 %v87, 0.5
    %v94 = vmul.f32 %v90, 0.5
    %v95 = vmul.f32 %v87, 0.044715
    %v96 = vmul.f32 %v90, 0.044715
    %v97 = vmul.f32 %v95, %v87
    %v98 = vmul.f32 %v96, %v90
    %v99 = vmul.f32 %v97, %v87
    %v100 = vmul.f32 %v98, %v90
    %v101 = vadd.f32 %v87, %v99
    %v102 = vadd.f32 %v90, %v100
    %v103 = vmul.f32 %v101, 0.7978846
    %v104 = vmul.f32 %v102, 0.7978846
    %v105 = vtanh.pop %v103
    %v106 = vtanh.pop %v104
    %v107 = vadd.f32 %v105, 1.0
    %v108 = vadd.f32 %v106, 1.0
    %v109 = vmul.f32 %v93, %v107
    %v110 = vmul.f32 %v94, %v108
    %v111 = vpack.c.bf16 %v110, %v109
    %v112 = vld [vmem:[%s3] sm:$0xf]
    %v113 = vld [vmem:[%s3 + $0x4] sm:$0xf]
    %v114 = vld [vmem:[%s3 + $0x8] sm:$0xf]
    %v115 = vld [vmem:[%s3 + $0xc] sm:$0xf]
    %v116 = vld [vmem:[%s3 + $0x10] sm:$0xf]
    %v117 = vld [vmem:[%s3 + $0x14] sm:$0xf]
    %v118 = vld [vmem:[%s3 + $0x18] sm:$0xf]
    %v119 = vld [vmem:[%s3 + $0x1c] sm:$0xf]
    %v120 = vld [vmem:[%s4] sm:$0x1]
    %v122 = vlaneseq
    %v123 = vshrl.u32 %v122, 7
    %v124 = vsub.s32 0, %v123
    %v125 = vrot.slane %v120, %v124
    %v135 = vunpack.c.l.b16 %v112
    %v136 = vunpack.c.l.b16 %v113
    %v137 = vunpack.c.l.b16 %v114
    %v138 = vunpack.c.l.b16 %v115
    %v139 = vunpack.c.l.b16 %v116
    %v140 = vunpack.c.l.b16 %v117
    %v141 = vunpack.c.l.b16 %v118
    %v142 = vunpack.c.l.b16 %v119
    %v143 = vpack.c.b16 %v136, %v135
    %v144 = vpack.c.b16 %v138, %v137
    %v145 = vpack.c.b16 %v140, %v139
    %v146 = vpack.c.b16 %v142, %v141
    %vm151 = vcmask 523264
    %v153 = vsel %vm151, %v111, 0
    %155 = vmatprep.subr.bf16.mxu0 0
    %156 = vmatpush1.bf16.msra.mxu0 %v143
    %157 = vmatprep.subr.bf16.mxu0 0
    %158 = vmatpush1.bf16.msra.mxu0 %v144
    %159 = vmatprep.subr.bf16.mxu0 0
    %160 = vmatpush1.bf16.msra.mxu0 %v145
    %161 = vmatprep.subr.bf16.mxu0 0
    %162 = vmatpush1.bf16.msra.mxu0 %v146
    %163 = vmatprep.subr.bf16.mxu0 0
    %164 = vmatpush1.bf16.msra.mxu0 0
    %165 = vmatprep.subr.bf16.mxu0 0
    %166 = vmatpush1.bf16.msra.mxu0 0
    %167 = vmatprep.subr.bf16.mxu0 0
    %168 = vmatpush1.bf16.msra.mxu0 0
    %169 = vmatprep.subr.bf16.mxu0 0
    %170 = vmatpush1.bf16.msra.mxu0 0
    %171 = vmatprep.subr.bf16.mxu0 0
    %172 = vmatpush1.bf16.msra.mxu0 0
    %173 = vmatprep.subr.bf16.mxu0 0
    %174 = vmatpush1.bf16.msra.mxu0 0
    %175 = vmatprep.subr.bf16.mxu0 0
    %176 = vmatpush1.bf16.msra.mxu0 0
    %177 = vmatprep.subr.bf16.mxu0 0
    %178 = vmatpush1.bf16.msra.mxu0 0
    %179 = vmatprep.subr.bf16.mxu0 0
    %180 = vmatpush1.bf16.msra.mxu0 0
    %181 = vmatprep.subr.bf16.mxu0 0
    %182 = vmatpush1.bf16.msra.mxu0 0
    %183 = vmatprep.subr.bf16.mxu0 0
    %184 = vmatpush1.bf16.msra.mxu0 0
    %185 = vmatprep.subr.bf16.mxu0 0
    %186 = vmatpush1.bf16.msra.mxu0 0
    %187 = vmatprep.mubr.bf16.mxu0 0
    %188 = vmatmul.mubr.bf16.gmra.mrb[0].mxu0 %v153
    %v189 = vpop.f32.mrb[0].mxu0
    %v190 = vadd.f32 %v125, %v189
    %v191 = vpop.f32.mrb[0].mxu0
    %v192 = vpop.f32.mrb[0].mxu0
    %v193 = vadd.f32 %v125, %v192
    %v194 = vpop.f32.mrb[0].mxu0
    %195 = vdwg.mxu0
    %v196 = vadd.f32 %v22, %v190
    %v197 = vadd.f32 %v23, %v193
    %198 = vst.msk [vmem:[#allocation2] sm:$0xff] %vm48, %v196
    %199 = vst.msk [vmem:[#allocation2 + $0x8] sm:$0xff] %vm48, %v197
    // Predicated region
    $region22: #{tpu_custom_call.1} parent=1 // pred_check
      _
    $region23: #{tpu_custom_call.1} parent=1 // pred_check_branch
      %201 = sbr.rel (0) target = $region25
    $region24: #{tpu_custom_call.1} parent=1 // pred_region
      %s203 = ssub.s32 256, 256
      %204 = vsyncadd [#allocation3], %s203
      %s205 = sshll.u32 [#allocation2], 4
      %s206 = int_to_ptr.vmem [resolvable:$true] %s205
      %211 = dma.vmem_to_hbm [thread:$0]  %s206, 256, %s5, [#allocation3], 128, 128, 8
    $region25: #{tpu_custom_call.1} parent=1 // pred_fallthru
      _
    // Predicated region
    $region26: #{tpu_custom_call.1} parent=1 // pred_check
      _
    $region27: #{tpu_custom_call.1} parent=1 // pred_check_branch
      %213 = sbr.rel (0) target = $region29
    $region28: #{tpu_custom_call.1} parent=1 // pred_region
      %214 = dma.done [#allocation3], 256
    $region29: #{tpu_custom_call.1} parent=1 // pred_fallthru
      _
    %215 = vsyncpa [#allocation3], 1

// kernel: tpu_custom_call.1
$region0: #{tpu_custom_call.1}
  #allocation0 [shape = 'u32[]', space=smem, size = 0x4, offset = 0x4, fixed_abs, tag = 'smem constant byte address 0x4 - core index']
  #allocation1 [shape = 'u32[144,128]{1,0:T(1,128)}', space=vmem, size = 0x12000, scoped, tag = 'internal scratch']
  %s0 = inlined_call_operand.vmem [shape: f32[16,32], index: 0, kind: input, shape index: {}]
  %s1 = inlined_call_operand.vmem [shape: bf16[32,64], index: 1, kind: input, shape index: {}]
  %s2 = inlined_call_operand.vmem [shape: f32[1,64], index: 2, kind: input, shape index: {}]
  %s3 = inlined_call_operand.vmem [shape: bf16[64,32], index: 3, kind: input, shape index: {}]
  %s4 = inlined_call_operand.vmem [shape: f32[1,32], index: 4, kind: input, shape index: {}]
  %s5 = inlined_call_operand.hbm [shape: f32[16,32], index: 5, kind: output, shape index: {}]
  %s6 = sld [smem:[#allocation0]]
  $region30: #{tpu_custom_call.1} parent=0
    _
  %s8 = ssub.s32 1, %s6
  %s9 = scalar_select 0, %s8, %s6
  $region1: #{tpu_custom_call.1} parent=0
    #allocation2 [shape = 'u8[8192]{0}', space=vmem, size = 0x2000, scoped, tag = 'output window, operand 0, single buffered']
    #allocation3 [shape = 's32[1]{0}', space=sflag, size = 0x4, scoped, tag = 'scoped memory for tpu_custom_call.1']
    %10 = vsyncpa [#allocation3], 0
    // Predicated region
    $region2: #{tpu_custom_call.1} parent=1 // pred_check
      _
    $region3: #{tpu_custom_call.1} parent=1 // pred_check_branch
      %12 = sbr.rel (0) target = $region5
    $region4: #{tpu_custom_call.1} parent=1 // pred_region
      _
    $region5: #{tpu_custom_call.1} parent=1 // pred_fallthru
      _
    // Predicated region
    $region6: #{tpu_custom_call.1} parent=1 // pred_check
      _
    $region7: #{tpu_custom_call.1} parent=1 // pred_check_branch
      %14 = sbr.rel (0) target = $region9
    $region8: #{tpu_custom_call.1} parent=1 // pred_region
      _
    $region9: #{tpu_custom_call.1} parent=1 // pred_fallthru
      _
    // Predicated region
    $region10: #{tpu_custom_call.1} parent=1 // pred_check
      _
    $region11: #{tpu_custom_call.1} parent=1 // pred_check_branch
      %16 = sbr.rel (0) target = $region13
    $region12: #{tpu_custom_call.1} parent=1 // pred_region
      _
    $region13: #{tpu_custom_call.1} parent=1 // pred_fallthru
      _
    // Predicated region
    $region14: #{tpu_custom_call.1} parent=1 // pred_check
      _
    $region15: #{tpu_custom_call.1} parent=1 // pred_check_branch
      %18 = sbr.rel (0) target = $region17
    $region16: #{tpu_custom_call.1} parent=1 // pred_region
      _
    $region17: #{tpu_custom_call.1} parent=1 // pred_fallthru
      _
    // Predicated region
    $region18: #{tpu_custom_call.1} parent=1 // pred_check
      _
    $region19: #{tpu_custom_call.1} parent=1 // pred_check_branch
      %20 = sbr.rel (0) target = $region21
    $region20: #{tpu_custom_call.1} parent=1 // pred_region
      _
    $region21: #{tpu_custom_call.1} parent=1 // pred_fallthru
      _
    %v22 = vld [vmem:[%s0] sm:$0xff]
    %v23 = vld [vmem:[%s0 + $0x8] sm:$0xff]
    %v24 = vpack.c.bf16 %v23, %v22
    %v25 = vld [vmem:[%s1] sm:$0xf]
    %v26 = vld [vmem:[%s1 + $0x4] sm:$0xf]
    %v27 = vld [vmem:[%s1 + $0x8] sm:$0xf]
    %v28 = vld [vmem:[%s1 + $0xc] sm:$0xf]
    %v29 = vld [vmem:[%s2] sm:$0x1]
    %v31 = vlaneseq
    %v32 = vshrl.u32 %v31, 7
    %v33 = vsub.s32 0, %v32
    %v34 = vrot.slane %v29, %v33
    %v40 = vunpack.c.l.b16 %v25
    %v41 = vunpack.c.l.b16 %v26
    %v42 = vunpack.c.l.b16 %v27
    %v43 = vunpack.c.l.b16 %v28
    %v44 = vpack.c.b16 %v41, %v40
    %v45 = vpack.c.b16 %v43, %v42
    %vm48 = vcmask 261120
    %v50 = vsel %vm48, %v24, 0
    %52 = vmatprep.subr.bf16.mxu0 0
    %53 = vmatpush1.bf16.msra.mxu0 %v44
    %54 = vmatprep.subr.bf16.mxu0 0
    %55 = vmatpush1.bf16.msra.mxu0 %v45
    %56 = vmatprep.subr.bf16.mxu0 0
    %57 = vmatpush1.bf16.msra.mxu0 0
    %58 = vmatprep.subr.bf16.mxu0 0
    %59 = vmatpush1.bf16.msra.mxu0 0
    %60 = vmatprep.subr.bf16.mxu0 0
    %61 = vmatpush1.bf16.msra.mxu0 0
    %62 = vmatprep.subr.bf16.mxu0 0
    %63 = vmatpush1.bf16.msra.mxu0 0
    %64 = vmatprep.subr.bf16.mxu0 0
    %65 = vmatpush1.bf16.msra.mxu0 0
    %66 = vmatprep.subr.bf16.mxu0 0
    %67 = vmatpush1.bf16.msra.mxu0 0
    %68 = vmatprep.subr.bf16.mxu0 0
    %69 = vmatpush1.bf16.msra.mxu0 0
    %70 = vmatprep.subr.bf16.mxu0 0
    %71 = vmatpush1.bf16.msra.mxu0 0
    %72 = vmatprep.subr.bf16.mxu0 0
    %73 = vmatpush1.bf16.msra.mxu0 0
    %74 = vmatprep.subr.bf16.mxu0 0
    %75 = vmatpush1.bf16.msra.mxu0 0
    %76 = vmatprep.subr.bf16.mxu0 0
    %77 = vmatpush1.bf16.msra.mxu0 0
    %78 = vmatprep.subr.bf16.mxu0 0
    %79 = vmatpush1.bf16.msra.mxu0 0
    %80 = vmatprep.subr.bf16.mxu0 0
    %81 = vmatpush1.bf16.msra.mxu0 0
    %82 = vmatprep.subr.bf16.mxu0 0
    %83 = vmatpush1.bf16.msra.mxu0 0
    %84 = vmatprep.mubr.bf16.mxu0 0
    %85 = vmatmul.mubr.bf16.gmra.mrb[0].mxu0 %v50
    %v86 = vpop.f32.mrb[0].mxu0
    %v87 = vadd.f32 %v34, %v86
    %v88 = vpop.f32.mrb[0].mxu0
    %v89 = vpop.f32.mrb[0].mxu0
    %v90 = vadd.f32 %v34, %v89
    %v91 = vpop.f32.mrb[0].mxu0
    %92 = vdwg.mxu0
    %v93 = vmul.f32 %v87, 0.5
    %v94 = vmul.f32 %v90, 0.5
    %v95 = vmul.f32 %v87, 0.044715
    %v96 = vmul.f32 %v90, 0.044715
    %v97 = vmul.f32 %v95, %v87
    %v98 = vmul.f32 %v96, %v90
    %v99 = vmul.f32 %v97, %v87
    %v100 = vmul.f32 %v98, %v90
    %v101 = vadd.f32 %v87, %v99
    %v102 = vadd.f32 %v90, %v100
    %v103 = vmul.f32 %v101, 0.7978846
    %v104 = vmul.f32 %v102, 0.7978846
    %v105 = vtanh.pop %v103
    %v106 = vtanh.pop %v104
    %v107 = vadd.f32 %v105, 1.0
    %v108 = vadd.f32 %v106, 1.0
    %v109 = vmul.f32 %v93, %v107
    %v110 = vmul.f32 %v94, %v108
    %v111 = vpack.c.bf16 %v110, %v109
    %v112 = vld [vmem:[%s3] sm:$0xf]
    %v113 = vld [vmem:[%s3 + $0x4] sm:$0xf]
    %v114 = vld [vmem:[%s3 + $0x8] sm:$0xf]
    %v115 = vld [vmem:[%s3 + $0xc] sm:$0xf]
    %v116 = vld [vmem:[%s3 + $0x10] sm:$0xf]
    %v117 = vld [vmem:[%s3 + $0x14] sm:$0xf]
    %v118 = vld [vmem:[%s3 + $0x18] sm:$0xf]
    %v119 = vld [vmem:[%s3 + $0x1c] sm:$0xf]
    %v120 = vld [vmem:[%s4] sm:$0x1]
    %v122 = vlaneseq
    %v123 = vshrl.u32 %v122, 7
    %v124 = vsub.s32 0, %v123
    %v125 = vrot.slane %v120, %v124
    %v135 = vunpack.c.l.b16 %v112
    %v136 = vunpack.c.l.b16 %v113
    %v137 = vunpack.c.l.b16 %v114
    %v138 = vunpack.c.l.b16 %v115
    %v139 = vunpack.c.l.b16 %v116
    %v140 = vunpack.c.l.b16 %v117
    %v141 = vunpack.c.l.b16 %v118
    %v142 = vunpack.c.l.b16 %v119
    %v143 = vpack.c.b16 %v136, %v135
    %v144 = vpack.c.b16 %v138, %v137
    %v145 = vpack.c.b16 %v140, %v139
    %v146 = vpack.c.b16 %v142, %v141
    %vm151 = vcmask 523264
    %v153 = vsel %vm151, %v111, 0
    %155 = vmatprep.subr.bf16.mxu0 0
    %156 = vmatpush1.bf16.msra.mxu0 %v143
    %157 = vmatprep.subr.bf16.mxu0 0
    %158 = vmatpush1.bf16.msra.mxu0 %v144
    %159 = vmatprep.subr.bf16.mxu0 0
    %160 = vmatpush1.bf16.msra.mxu0 %v145
    %161 = vmatprep.subr.bf16.mxu0 0
    %162 = vmatpush1.bf16.msra.mxu0 %v146
    %163 = vmatprep.subr.bf16.mxu0 0
    %164 = vmatpush1.bf16.msra.mxu0 0
    %165 = vmatprep.subr.bf16.mxu0 0
    %166 = vmatpush1.bf16.msra.mxu0 0
    %167 = vmatprep.subr.bf16.mxu0 0
    %168 = vmatpush1.bf16.msra.mxu0 0
    %169 = vmatprep.subr.bf16.mxu0 0
    %170 = vmatpush1.bf16.msra.mxu0 0
    %171 = vmatprep.subr.bf16.mxu0 0
    %172 = vmatpush1.bf16.msra.mxu0 0
    %173 = vmatprep.subr.bf16.mxu0 0
    %174 = vmatpush1.bf16.msra.mxu0 0
    %175 = vmatprep.subr.bf16.mxu0 0
    %176 = vmatpush1.bf16.msra.mxu0 0
    %177 = vmatprep.subr.bf16.mxu0 0
    %178 = vmatpush1.bf16.msra.mxu0 0
    %179 = vmatprep.subr.bf16.mxu0 0
    %180 = vmatpush1.bf16.msra.mxu0 0
    %181 = vmatprep.subr.bf16.mxu0 0
    %182 = vmatpush1.bf16.msra.mxu0 0
    %183 = vmatprep.subr.bf16.mxu0 0
    %184 = vmatpush1.bf16.msra.mxu0 0
    %185 = vmatprep.subr.bf16.mxu0 0
    %186 = vmatpush1.bf16.msra.mxu0 0
    %187 = vmatprep.mubr.bf16.mxu0 0
    %188 = vmatmul.mubr.bf16.gmra.mrb[0].mxu0 %v153
    %v189 = vpop.f32.mrb[0].mxu0
    %v190 = vadd.f32 %v125, %v189
    %v191 = vpop.f32.mrb[0].mxu0
    %v192 = vpop.f32.mrb[0].mxu0
    %v193 = vadd.f32 %v125, %v192
    %v194 = vpop.f32.mrb[0].mxu0
    %195 = vdwg.mxu0
    %v196 = vadd.f32 %v22, %v190
    %v197 = vadd.f32 %v23, %v193
    %198 = vst.msk [vmem:[#allocation2] sm:$0xff] %vm48, %v196
    %199 = vst.msk [vmem:[#allocation2 + $0x8] sm:$0xff] %vm48, %v197
    // Predicated region
    $region22: #{tpu_custom_call.1} parent=1 // pred_check
      _
    $region23: #{tpu_custom_call.1} parent=1 // pred_check_branch
      %201 = sbr.rel (0) target = $region25
    $region24: #{tpu_custom_call.1} parent=1 // pred_region
      %s203 = ssub.s32 256, 256
      %204 = vsyncadd [#allocation3], %s203
      %s205 = sshll.u32 [#allocation2], 4
      %s206 = int_to_ptr.vmem [resolvable:$true] %s205
      %211 = dma.vmem_to_hbm [thread:$0]  %s206, 256, %s5, [#allocation3], 128, 128, 8
    $region25: #{tpu_custom_call.1} parent=1 // pred_fallthru
      _
    // Predicated region
    $region26: #{tpu_custom_call.1} parent=1 // pred_check
      _
    $region27: #{tpu_custom_call.1} parent=1 // pred_check_branch
      %213 = sbr.rel (0) target = $region29
    $region28: #{tpu_custom_call.1} parent=1 // pred_region
      %214 = dma.done [#allocation3], 256
    $region29: #{tpu_custom_call.1} parent=1 // pred_fallthru
      _
    %215 = vsyncpa [#allocation3], 1

</llo_original>
